<compile_context>
chip_gen: v6e
topology: v6e:2x2x1
jax: 0.10.0
libtpu: 0.0.40
codegen_flags: <defaults>
</compile_context>

<pallas_src>
import math

import jax
import jax.numpy as jnp
import numpy as np
from jax.experimental import pallas as pl
from jax.experimental.pallas import tpu as pltpu

N_QUBITS = 2
N_LAYERS = 3
N_MEAS = 2                         # expval(Z0), expval(Z1)
LANES = 128
ROW_WIDTH = N_QUBITS * LANES       # 256: one row = 128 samples, (x0, x1) interleaved
N_TERMS = 9                        # [1, s, c, s_sw, c_sw, s*s_sw, s*c_sw, c*s_sw, c*c_sw]
MAX_BLOCK_ROWS = 512               # up to 512 * 128 = 65536 samples per grid step


# ----------------------------------------------------------------------------
# Pallas kernel.  x_ref holds lane-interleaved samples: even lane 2k = x0 of
# sample k, odd lane 2k+1 = x1 of sample k.  The output uses the same layout
# (even lane = <Z0>, odd lane = <Z1>), so no transpose is ever needed.
# ----------------------------------------------------------------------------
def qnode_kernel(coef_ref, x_ref, o_ref):
    x = x_ref[...].astype(jnp.float32)                 # (rows, 256)
    s = jnp.sin(x)
    c = jnp.cos(x)

    # Qubit-0 data sits on even lanes, qubit-1 data on odd lanes.
    lane = jax.lax.broadcasted_iota(jnp.int32, (1, ROW_WIDTH), 1)
    is_q0 = (lane & 1) == 0

    # Pairwise lane swap (partner qubit's value on every lane): 2 XLU rolls + 1 select.
    # roll(v, W-1)[j] == v[j+1] and roll(v, 1)[j] == v[j-1] (jnp.roll semantics);
    # only the non-wrapping lanes are selected, so the cyclic wrap never matters.
    s_sw = jnp.where(is_q0, pltpu.roll(s, ROW_WIDTH - 1, 1), pltpu.roll(s, 1, 1))
    c_sw = jnp.where(is_q0, pltpu.roll(c, ROW_WIDTH - 1, 1), pltpu.roll(c, 1, 1))

    def k(t):                                          # (1, 256): lane-interleaved coefs
        return coef_ref[t]

    # Tree-summed 9-term bilinear form; all signs pre-folded into the coefficients.
    acc0 = k(0) + (k(1) * s + k(2) * c)
    acc1 = k(3) * s_sw + k(4) * c_sw
    acc2 = k(5) * (s * s_sw) + k(6) * (s * c_sw)
    acc3 = k(7) * (c * s_sw) + k(8) * (c * c_sw)
    o_ref[...] = ((acc0 + acc1) + (acc2 + acc3)).astype(o_ref.dtype)


# ----------------------------------------------------------------------------
# Batch-independent parameter folding (plain JAX, tiny 4x4 matrices).
# ----------------------------------------------------------------------------
def rot_gate_entries(weights):
    # PennyLane Rot(phi, theta, omega) = RZ(omega) RY(theta) RZ(phi), entries row-major.
    phi, theta, omega = weights[..., 0], weights[..., 1], weights[..., 2]
    ct, st = jnp.cos(theta / 2), jnp.sin(theta / 2)
    a = (phi + omega) / 2
    d = (phi - omega) / 2
    u00 = jnp.exp(-1j * a) * ct
    u01 = -jnp.exp(1j * d) * st
    u10 = jnp.exp(-1j * d) * st
    u11 = jnp.exp(1j * a) * ct
    u = jnp.stack([u00, u01, u10, u11], axis=-1).reshape(-1, 4)   # (L*n_wires, 4)
    return u.astype(jnp.complex64)


def entangling_unitary(weights):
    """Full 4x4 unitary of StronglyEntanglingLayers(3 layers, 2 wires)."""
    g = rot_gate_entries(weights.astype(jnp.float32))             # (6, 4) complex64
    eye2 = jnp.eye(2, dtype=jnp.complex64)
    cnot01 = jnp.array([[1, 0, 0, 0], [0, 1, 0, 0],
                        [0, 0, 0, 1], [0, 0, 1, 0]], dtype=jnp.complex64)
    cnot10 = jnp.array([[1, 0, 0, 0], [0, 0, 0, 1],
                        [0, 0, 1, 0], [0, 1, 0, 0]], dtype=jnp.complex64)
    u_total = jnp.eye(4, dtype=jnp.complex64)
    for l in range(N_LAYERS):
        for w in range(N_QUBITS):
            u2 = g[l * N_QUBITS + w].reshape(2, 2)
            full = jnp.kron(u2, eye2) if w == 0 else jnp.kron(eye2, u2)
            u_total = full @ u_total
        u_total = cnot01 @ u_total
        u_total = cnot10 @ u_total
    return u_total


def _bloch_term_vector(m, qubit_swapped):
    """9 real coefficients of <m> = sum_{P,Q in {I,Y,Z}} w_PQ <P>_0 <Q>_1 for the
    RX-embedded product state (<Y>_i = -sin x_i, <Z>_i = cos x_i, <X>_i = 0).

    Returned in the kernel's term order
        [1, s, c, s_sw, c_sw, s*s_sw, s*c_sw, c*s_sw, c*c_sw].
    On even lanes (qubit_swapped=False) s/c hold the qubit-0 trig values; on odd lanes
    (qubit_swapped=True) they hold the qubit-1 values, so the qubit roles in the
    coefficient layout are exchanged.  The <Y> minus signs are folded in here.
    """
    eye2 = jnp.eye(2, dtype=jnp.complex64)
    pauli_y = jnp.array([[0, -1j], [1j, 0]], dtype=jnp.complex64)
    pauli_z = jnp.array([[1, 0], [0, -1]], dtype=jnp.complex64)

    def w(p, q):
        return jnp.real(jnp.trace(m @ jnp.kron(p, q))) * 0.25

    w_ii = w(eye2, eye2)
    w_yi, w_zi = w(pauli_y, eye2), w(pauli_z, eye2)
    w_iy, w_iz = w(eye2, pauli_y), w(eye2, pauli_z)
    w_yy, w_yz = w(pauli_y, pauli_y), w(pauli_y, pauli_z)
    w_zy, w_zz = w(pauli_z, pauli_y), w(pauli_z, pauli_z)

    if not qubit_swapped:   # even lanes: s,c <- qubit 0 ; s_sw,c_sw <- qubit 1
        v = [w_ii, -w_yi, w_zi, -w_iy, w_iz, w_yy, -w_yz, -w_zy, w_zz]
    else:                   # odd lanes:  s,c <- qubit 1 ; s_sw,c_sw <- qubit 0
        v = [w_ii, -w_iy, w_iz, -w_yi, w_zi, w_yy, -w_zy, -w_yz, w_zz]
    return jnp.stack(v)


def observable_coefficient_table(weights):
    """(N_TERMS, 1, 256) f32 table; even lanes carry the <Z0> coefficients and odd
    lanes the <Z1> coefficients, matching the lane-interleaved sample layout."""
    u = entangling_unitary(weights)
    z0 = jnp.diag(jnp.array([1, 1, -1, -1], dtype=jnp.complex64))   # Z on wire 0
    z1 = jnp.diag(jnp.array([1, -1, 1, -1], dtype=jnp.complex64))   # Z on wire 1
    m0 = u.conj().T @ z0 @ u
    m1 = u.conj().T @ z1 @ u
    v0 = _bloch_term_vector(m0, qubit_swapped=False)                # (9,)
    v1 = _bloch_term_vector(m1, qubit_swapped=True)                 # (9,)
    pair = jnp.stack([v0, v1], axis=-1)                             # (9, 2)
    table = jnp.tile(pair, (1, LANES))                              # (9, 256) interleaved
    return table.reshape(N_TERMS, 1, ROW_WIDTH).astype(jnp.float32)


# ----------------------------------------------------------------------------
# TorchLayer.forward equivalent.
# ----------------------------------------------------------------------------
def torch_layer_forward(inputs, weights):
    batch_dims = inputs.shape[:-1]
    out_dtype = inputs.dtype
    io_dtype = out_dtype if out_dtype in (jnp.float32, jnp.bfloat16) else jnp.float32

    x = inputs.reshape(-1, N_QUBITS).astype(io_dtype)
    b = x.shape[0]
    if b == 0:
        return jnp.zeros((*batch_dims, N_MEAS), dtype=out_dtype)

    rows = int(pl.cdiv(b, LANES))                  # one row = 128 samples
    b_pad = rows * LANES
    if b_pad != b:                                 # only the ragged tail is padded
        x = jnp.pad(x, ((0, b_pad - b), (0, 0)))
    xr = x.reshape(rows, ROW_WIDTH)                # row-major view: no transpose

    block_rows = rows if rows <= MAX_BLOCK_ROWS else MAX_BLOCK_ROWS
    grid = (int(pl.cdiv(rows, block_rows)),)

    coef = observable_coefficient_table(weights)   # (9, 1, 256) f32

    out = pl.pallas_call(
        qnode_kernel,
        out_shape=jax.ShapeDtypeStruct((rows, ROW_WIDTH), io_dtype),
        grid=grid,
        in_specs=[
            pl.BlockSpec((N_TERMS, 1, ROW_WIDTH), lambda i: (0, 0, 0)),   # coefficients
            pl.BlockSpec((block_rows, ROW_WIDTH), lambda i: (i, 0)),      # inputs
        ],
        out_specs=pl.BlockSpec((block_rows, ROW_WIDTH), lambda i: (i, 0)),
        compiler_params=pltpu.CompilerParams(dimension_semantics=("parallel",)),
    )(coef, xr)

    out = out.reshape(b_pad, N_MEAS)[:b]           # interleaved (z0, z1) per sample
    return out.reshape(*batch_dims, N_MEAS).astype(out_dtype)


# ----------------------------------------------------------------------------
# Pure-JAX reference (complex statevector, unfused gates) for correctness.
# ----------------------------------------------------------------------------
def reference_forward(inputs, weights):
    batch_dims = inputs.shape[:-1]
    x = inputs.reshape(-1, inputs.shape[-1]).astype(jnp.float32)
    b = x.shape[0]
    state = jnp.zeros((b, 4), jnp.complex64).at[:, 0].set(1.0)

    def apply_gate(state, u00, u01, u10, u11, wire):
        if wire == 0:
            i0, i1 = jnp.array([0, 1]), jnp.array([2, 3])
        else:
            i0, i1 = jnp.array([0, 2]), jnp.array([1, 3])
        u00, u01, u10, u11 = (jnp.reshape(u, (-1, 1)) for u in (u00, u01, u10, u11))
        a, bb = state[:, i0], state[:, i1]
        na = u00 * a + u01 * bb
        nb = u10 * a + u11 * bb
        return state.at[:, i0].set(na).at[:, i1].set(nb)

    for w in range(N_QUBITS):
        th = x[:, w]
        c = jnp.cos(th / 2).astype(jnp.complex64)
        s = jnp.sin(th / 2).astype(jnp.complex64)
        state = apply_gate(state, c, -1j * s, -1j * s, c, w)

    g = rot_gate_entries(weights.astype(jnp.float32))
    for l in range(N_LAYERS):
        for w in range(N_QUBITS):
            u = g[l * N_QUBITS + w]
            state = apply_gate(state, u[0], u[1], u[2], u[3], w)
        state = state[:, jnp.array([0, 1, 3, 2])]   # CNOT(0,1)
        state = state[:, jnp.array([0, 3, 2, 1])]   # CNOT(1,0)

    p = jnp.abs(state) ** 2
    z0 = p[:, 0] + p[:, 1] - p[:, 2] - p[:, 3]
    z1 = p[:, 0] - p[:, 1] + p[:, 2] - p[:, 3]
    out = jnp.stack([z0, z1], axis=1)
    return out.reshape(*batch_dims, N_MEAS).astype(inputs.dtype)


if __name__ == "__main__":
    key = jax.random.PRNGKey(0)
    k_x, k_w = jax.random.split(key)

    # inputs: (*batch_dims, n_qubits) = (2, 4, 2); leading dims flattened in forward
    inputs = jax.random.uniform(k_x, (2, 4, N_QUBITS), jnp.float32,
                                minval=-1.0, maxval=1.0)
    # default TorchLayer init: uniform over [0, 2*pi), weight_shapes={"weights": (3, 2, 3)}
    weights = jax.random.uniform(k_w, (N_LAYERS, N_QUBITS, 3), jnp.float32,
                                 minval=0.0, maxval=2.0 * math.pi)

    out = jax.jit(torch_layer_forward)(inputs, weights)
    out = jax.block_until_ready(out)

    ref = reference_forward(inputs, weights)
    assert out.shape == (2, 4, N_MEAS), out.shape
    np.testing.assert_allclose(np.asarray(out), np.asarray(ref), rtol=1e-4, atol=2e-5)

    print("KERNEL_OK")
</pallas_src>

<mosaic_0001>
module attributes {stable_mosaic.version = 11 : i64} {
  func.func @qnode_kernel(%arg0: i32, %arg1: memref<9x1x256xf32, #tpu.memory_space<vmem>>, %arg2: memref<1x256xf32, #tpu.memory_space<vmem>>, %arg3: memref<1x256xf32, #tpu.memory_space<vmem>>) attributes {dimension_semantics = [#tpu.dimension_semantics<parallel>], iteration_bounds = array<i64: 1>, scalar_prefetch = 0 : i64, scratch_operands = 0 : i64, tpu.core_type = #tpu.core_type<tc>, window_params = [{pipeline_mode = #tpu.pipeline_mode<synchronous>, transform_indices = @transform_0, window_bounds = array<i64: 9, 1, 256>}, {transform_indices = @transform_1, window_bounds = array<i64: 1, 256>}, {transform_indices = @transform_2, window_bounds = array<i64: 1, 256>}]} {
    %c0 = arith.constant 0 : index
    %c0_0 = arith.constant 0 : index
    %0 = vector.load %arg2[%c0, %c0_0] : memref<1x256xf32, #tpu.memory_space<vmem>>, vector<1x256xf32>
    %1 = math.sin %0 : vector<1x256xf32>
    %2 = math.cos %0 : vector<1x256xf32>
    %3 = tpu.iota {dimensions = array<i32: 1>} : vector<1x256xi32>
    %c1_i32 = arith.constant 1 : i32
    %4 = vector.broadcast %c1_i32 : i32 to vector<1x256xi32>
    %5 = arith.andi %3, %4 : vector<1x256xi32>
    %c0_i32 = arith.constant 0 : i32
    %6 = vector.broadcast %c0_i32 : i32 to vector<1x256xi32>
    %7 = arith.cmpi eq, %5, %6 : vector<1x256xi32>
    %c255_i32 = arith.constant 255 : i32
    %8 = tpu.dynamic_rotate %1 by %c255_i32 dim 1 : vector<1x256xf32>, i32 -> vector<1x256xf32>
    %c1_i32_1 = arith.constant 1 : i32
    %9 = tpu.dynamic_rotate %1 by %c1_i32_1 dim 1 : vector<1x256xf32>, i32 -> vector<1x256xf32>
    %10 = arith.select %7, %8, %9 : vector<1x256xi1>, vector<1x256xf32>
    %c255_i32_2 = arith.constant 255 : i32
    %11 = tpu.dynamic_rotate %2 by %c255_i32_2 dim 1 : vector<1x256xf32>, i32 -> vector<1x256xf32>
    %c1_i32_3 = arith.constant 1 : i32
    %12 = tpu.dynamic_rotate %2 by %c1_i32_3 dim 1 : vector<1x256xf32>, i32 -> vector<1x256xf32>
    %13 = arith.select %7, %11, %12 : vector<1x256xi1>, vector<1x256xf32>
    %c0_4 = arith.constant 0 : index
    %c0_5 = arith.constant 0 : index
    %c0_6 = arith.constant 0 : index
    %14 = vector.load %arg1[%c0_4, %c0_5, %c0_6] : memref<9x1x256xf32, #tpu.memory_space<vmem>>, vector<1x1x256xf32>
    %15 = vector.shape_cast %14 : vector<1x1x256xf32> to vector<1x256xf32>
    %c1 = arith.constant 1 : index
    %c0_7 = arith.constant 0 : index
    %c0_8 = arith.constant 0 : index
    %16 = vector.load %arg1[%c1, %c0_7, %c0_8] : memref<9x1x256xf32, #tpu.memory_space<vmem>>, vector<1x1x256xf32>
    %17 = vector.shape_cast %16 : vector<1x1x256xf32> to vector<1x256xf32>
    %18 = arith.mulf %17, %1 : vector<1x256xf32>
    %c2 = arith.constant 2 : index
    %c0_9 = arith.constant 0 : index
    %c0_10 = arith.constant 0 : index
    %19 = vector.load %arg1[%c2, %c0_9, %c0_10] : memref<9x1x256xf32, #tpu.memory_space<vmem>>, vector<1x1x256xf32>
    %20 = vector.shape_cast %19 : vector<1x1x256xf32> to vector<1x256xf32>
    %21 = arith.mulf %20, %2 : vector<1x256xf32>
    %22 = arith.addf %18, %21 : vector<1x256xf32>
    %23 = arith.addf %15, %22 : vector<1x256xf32>
    %c3 = arith.constant 3 : index
    %c0_11 = arith.constant 0 : index
    %c0_12 = arith.constant 0 : index
    %24 = vector.load %arg1[%c3, %c0_11, %c0_12] : memref<9x1x256xf32, #tpu.memory_space<vmem>>, vector<1x1x256xf32>
    %25 = vector.shape_cast %24 : vector<1x1x256xf32> to vector<1x256xf32>
    %26 = arith.mulf %25, %10 : vector<1x256xf32>
    %c4 = arith.constant 4 : index
    %c0_13 = arith.constant 0 : index
    %c0_14 = arith.constant 0 : index
    %27 = vector.load %arg1[%c4, %c0_13, %c0_14] : memref<9x1x256xf32, #tpu.memory_space<vmem>>, vector<1x1x256xf32>
    %28 = vector.shape_cast %27 : vector<1x1x256xf32> to vector<1x256xf32>
    %29 = arith.mulf %28, %13 : vector<1x256xf32>
    %30 = arith.addf %26, %29 : vector<1x256xf32>
    %c5 = arith.constant 5 : index
    %c0_15 = arith.constant 0 : index
    %c0_16 = arith.constant 0 : index
    %31 = vector.load %arg1[%c5, %c0_15, %c0_16] : memref<9x1x256xf32, #tpu.memory_space<vmem>>, vector<1x1x256xf32>
    %32 = vector.shape_cast %31 : vector<1x1x256xf32> to vector<1x256xf32>
    %33 = arith.mulf %1, %10 : vector<1x256xf32>
    %34 = arith.mulf %32, %33 : vector<1x256xf32>
    %c6 = arith.constant 6 : index
    %c0_17 = arith.constant 0 : index
    %c0_18 = arith.constant 0 : index
    %35 = vector.load %arg1[%c6, %c0_17, %c0_18] : memref<9x1x256xf32, #tpu.memory_space<vmem>>, vector<1x1x256xf32>
    %36 = vector.shape_cast %35 : vector<1x1x256xf32> to vector<1x256xf32>
    %37 = arith.mulf %1, %13 : vector<1x256xf32>
    %38 = arith.mulf %36, %37 : vector<1x256xf32>
    %39 = arith.addf %34, %38 : vector<1x256xf32>
    %c7 = arith.constant 7 : index
    %c0_19 = arith.constant 0 : index
    %c0_20 = arith.constant 0 : index
    %40 = vector.load %arg1[%c7, %c0_19, %c0_20] : memref<9x1x256xf32, #tpu.memory_space<vmem>>, vector<1x1x256xf32>
    %41 = vector.shape_cast %40 : vector<1x1x256xf32> to vector<1x256xf32>
    %42 = arith.mulf %2, %10 : vector<1x256xf32>
    %43 = arith.mulf %41, %42 : vector<1x256xf32>
    %c8 = arith.constant 8 : index
    %c0_21 = arith.constant 0 : index
    %c0_22 = arith.constant 0 : index
    %44 = vector.load %arg1[%c8, %c0_21, %c0_22] : memref<9x1x256xf32, #tpu.memory_space<vmem>>, vector<1x1x256xf32>
    %45 = vector.shape_cast %44 : vector<1x1x256xf32> to vector<1x256xf32>
    %46 = arith.mulf %2, %13 : vector<1x256xf32>
    %47 = arith.mulf %45, %46 : vector<1x256xf32>
    %48 = arith.addf %43, %47 : vector<1x256xf32>
    %49 = arith.addf %23, %30 : vector<1x256xf32>
    %50 = arith.addf %39, %48 : vector<1x256xf32>
    %51 = arith.addf %49, %50 : vector<1x256xf32>
    %c0_23 = arith.constant 0 : index
    %c0_24 = arith.constant 0 : index
    %52 = vector.load %arg3[%c0_23, %c0_24] : memref<1x256xf32, #tpu.memory_space<vmem>>, vector<1x256xf32>
    tpu.vector_store %arg3[%c0_23, %c0_24], %51 {strides = array<i32>} : memref<1x256xf32, #tpu.memory_space<vmem>>, vector<1x256xf32>,
    return
  }
  func.func @transform_0(%arg0: i32) -> (i32, i32, i32) {
    %c0_i32 = arith.constant 0 : i32
    %c0_i32_0 = arith.constant 0 : i32
    %c0_i32_1 = arith.constant 0 : i32
    %c0_i32_2 = arith.constant 0 : i32
    return %c0_i32, %c0_i32_0, %c0_i32_1 : i32, i32, i32
  }
  func.func @transform_1(%arg0: i32) -> (i32, i32) {
    %c0_i32 = arith.constant 0 : i32
    %c0_i32_0 = arith.constant 0 : i32
    return %arg0, %c0_i32 : i32, i32
  }
  func.func @transform_2(%arg0: i32) -> (i32, i32) {
    %c0_i32 = arith.constant 0 : i32
    %c0_i32_0 = arith.constant 0 : i32
    return %arg0, %c0_i32 : i32, i32
  }
}

</mosaic_0001>

<llo_original>
// kernel: mul.57
$region0: #{mul.57}
  %s0 = inlined_call_operand.vmem [shape: f32[4], index: 0, kind: input, shape index: {}]
  %s1 = inlined_call_operand.vmem [shape: f32[2,2], index: 1, kind: output, shape index: {}]
  $region1: #{mul.57} parent=0
    #allocation0 [shape = 'u8[4096]{0}', space=vmem, size = 0x1000, scoped, tag = 'scoped mem for output reshape']
    #allocation1 [shape = 'u8[4096]{0}', space=vmem, size = 0x1000, scoped, tag = 'scoped mem for input reshape']
    %s3 = sshll.u32 1, 1
    %s4 = ssub.s32 %s3, 1
    %v5 = vld [vmem:[%s0] sm:%s4]
    %6 = vst [vmem:[#allocation1] sm:%s4] %v5
    %v7 = vld [vmem:[#allocation1] sm:$0x1]
    %vm8 = vcmask 15360
    %9 = vst.msk [vmem:[#allocation0] sm:$0x1] %vm8, %v7
    %v10 = vld [vmem:[#allocation1] sm:$0x1]
    %11 = vrot.lane.b32.xlu0 %v10, 126
    %v12 = vpop.permute.xlu0 %11
    %vm13 = vcmask 15360
    %s14 = scalar_lea.vmem [#allocation0], 1
    %15 = vst.msk [vmem:[%s14] sm:$0x1] %vm13, %v12
    %s17 = sshll.u32 1, 2
    %s18 = ssub.s32 %s17, 1
    %v20 = vld [vmem:[#allocation0] sm:%s18]
    %s21 = sshll.u32 1, 2
    %s22 = ssub.s32 %s21, 1
    %23 = vst [vmem:[%s1] sm:%s22] %v20

// kernel: torch_layer_forward.1
$region0: #{torch_layer_forward.1}
  #allocation0 [shape = 'u32[]', space=smem, size = 0x4, offset = 0x4, fixed_abs, tag = 'smem constant byte address 0x4 - core index']
  #allocation1 [shape = 'u32[144,128]{1,0:T(1,128)}', space=vmem, size = 0x12000, scoped, tag = 'internal scratch']
  %s0 = inlined_call_operand.vmem [shape: f32[9,1,256], index: 0, kind: input, shape index: {}]
  %s1 = inlined_call_operand.vmem [shape: f32[1,256], index: 1, kind: input, shape index: {}]
  %s2 = inlined_call_operand.vmem [shape: f32[1,256], index: 2, kind: output, shape index: {}]
  %s3 = sld [smem:[#allocation0]]
  $region18: #{torch_layer_forward.1} parent=0
    _
  %s5 = ssub.s32 1, %s3
  %s6 = scalar_select 0, %s5, %s3
  // Predicated region
  $region2: #{torch_layer_forward.1} parent=0 // pred_check
    _
  $region3: #{torch_layer_forward.1} parent=0 // pred_check_branch
    %8 = sbr.rel (0) target = $region5
  $region4: #{torch_layer_forward.1} parent=0 // pred_region
    _
  $region5: #{torch_layer_forward.1} parent=0 // pred_fallthru
    _
  // Predicated region
  $region6: #{torch_layer_forward.1} parent=0 // pred_check
    _
  $region7: #{torch_layer_forward.1} parent=0 // pred_check_branch
    %10 = sbr.rel (0) target = $region9
  $region8: #{torch_layer_forward.1} parent=0 // pred_region
    _
  $region9: #{torch_layer_forward.1} parent=0 // pred_fallthru
    _
  %v11 = vld [vmem:[%s1] sm:$0x3]
  %v12 = vand.u32 2147483647, %v11
  %vm13 = vcmp.le.f32.partialorder %v12, 0.7853982
  %vm14 = vcmp.lt.s32.totalorder %v11, 0
  %v15 = vand.u32 %v11, 2139095040
  %v16 = vshrl.u32 %v15, 23
  %v17 = vsub.s32 %v16, 127
  %v18 = vand.u32 2147483647, %v11
  %v19 = vand.u32 %v18, 8388607
  %v20 = vor.u32 %v19, 8388608
  %v21 = vsub.s32 0, %v20
  %v22 = vadd.s32 %v17, 1
  %vm23 = vcmp.gt.s32.totalorder %v22, 0
  %v24 = vsel %vm23, %v22, 0
  %v25 = vshrl.u32 %v24, 5
  %v26 = vand.u32 %v24, 31
  %v27 = vsub.s32 32, %v26
  %v28 = vshrl.u32 683565275, %v27
  %v29 = vshll.u32 683565275, %v26
  %v30 = vshrl.u32 2475754826, %v27
  %v31 = vor.u32 %v29, %v30
  %v32 = vshll.u32 2475754826, %v26
  %v33 = vshrl.u32 2131351028, %v27
  %v34 = vor.u32 %v32, %v33
  %v35 = vshll.u32 2131351028, %v26
  %v36 = vshrl.u32 2102212464, %v27
  %v37 = vor.u32 %v35, %v36
  %v38 = vshll.u32 2102212464, %v26
  %v39 = vshrl.u32 920167782, %v27
  %v40 = vor.u32 %v38, %v39
  %v41 = vshll.u32 920167782, %v26
  %v42 = vshrl.u32 1326507024, %v27
  %v43 = vor.u32 %v41, %v42
  %vm44 = vcmp.lt.s32.totalorder %v25, 1
  %vm45 = vcmp.lt.s32.totalorder %v25, 2
  %vm46 = vcmp.lt.s32.totalorder %v25, 3
  %vm47 = vcmp.lt.s32.totalorder %v25, 4
  %v48 = vsel %vm44, %v28, %v31
  %v49 = vsel %vm47, %v37, 2102212464
  %v50 = vsel %vm46, %v34, %v49
  %v51 = vsel %vm45, %v48, %v50
  %v52 = vsel %vm44, %v31, %v34
  %v53 = vsel %vm47, %v40, 920167782
  %v54 = vsel %vm46, %v37, %v53
  %v55 = vsel %vm45, %v52, %v54
  %v56 = vsel %vm44, %v34, %v37
  %v57 = vsel %vm47, %v43, 1326507024
  %v58 = vsel %vm46, %v40, %v57
  %v59 = vsel %vm45, %v56, %v58
  %v60 = vshll.u32 %v20, 8
  %v61 = vmul.u32.u64.compose %v60, %v59
  %v62 = vextract.low.u32 %v61
  %v63 = vextract.high.u32 %v61
  %v64 = vmul.u32.u64.compose %v60, %v55
  %v65 = vextract.low.u32 %v64
  %v66 = vextract.high.u32 %v64
  %v67 = vmul.u32 %v60, %v51
  %v68 = vadd.s32 %v63, %v65
  %vm69 = vc.u32 %v63, %v65
  %v70 = vadd.s32 %v66, 1
  %v71 = vsel %vm69, %v70, %v66
  %v72 = vadd.s32 %v67, %v71
  %v73 = vadd.s32 %v72, 536870912
  %v74 = vshrl.u32 %v73, 30
  %v75 = vshll.u32 %v74, 30
  %v76 = vsub.s32 %v72, %v75
  %vm77 = vcmp.lt.s32.totalorder %v76, 0
  %v78 = vsub.s32 0, %v76
  %v79 = vsel %vm77, %v78, %v76
  %v80 = vclz %v79
  %v81 = vsub.s32 %v80, 2
  %vm82 = vcmp.gt.s32.totalorder 0, %v81
  %v83 = vsel %vm82, 0, %v81
  %v84 = vsub.s32 32, %v83
  %v85 = vshll.u32 %v76, %v83
  %v86 = vshrl.u32 %v68, %v84
  %v87 = vor.u32 %v85, %v86
  %v88 = vsub.s32 4294967266, %v83
  %v89 = vadd.s32 %v88, 127
  %v90 = vshll.u32 %v89, 23
  %v91 = vor.u32 4788187, %v90
  %v92 = vand.u32 2147483647, %v91
  %v94 = vcvt.s32.f32 %v87
  %v95 = vmul.f32 %v94, %v92
  %v96 = vxor.u32 %v95, 2147483648
  %v97 = vsel %vm14, %v96, %v95
  %v98 = vsub.s32 4, %v74
  %v99 = vsel %vm14, %v98, %v74
  %v100 = vsel %vm13, %v11, %v97
  %v101 = vsel %vm13, 0, %v99
  %v102 = vcosq.f32.pop %v100
  %v103 = vsinq.f32.pop %v100
  %vm104 = vweird.f32 %v11
  %v105 = vadd.s32 %v101, 3
  %v106 = vand.u32 %v105, 3
  %vm107 = vcmp.lt.s32.totalorder %v106, 2
  %vm108 = vcmp.eq.s32.totalorder %v106, 0
  %v109 = vxor.u32 %v103, 2147483648
  %v110 = vsel %vm108, %v102, %v109
  %vm111 = vcmp.eq.s32.totalorder %v106, 2
  %v112 = vxor.u32 %v102, 2147483648
  %v113 = vsel %vm111, %v112, %v103
  %v114 = vsel %vm107, %v110, %v113
  %v115 = vsel %vm104, nan, %v114
  %v116 = vand.u32 2147483647, %v11
  %vm117 = vcmp.le.f32.partialorder %v116, 0.7853982
  %vm118 = vcmp.lt.s32.totalorder %v11, 0
  %v119 = vand.u32 %v11, 2139095040
  %v120 = vshrl.u32 %v119, 23
  %v121 = vsub.s32 %v120, 127
  %v122 = vand.u32 2147483647, %v11
  %v123 = vand.u32 %v122, 8388607
  %v124 = vor.u32 %v123, 8388608
  %v125 = vsub.s32 0, %v124
  %v126 = vadd.s32 %v121, 1
  %vm127 = vcmp.gt.s32.totalorder %v126, 0
  %v128 = vsel %vm127, %v126, 0
  %v129 = vshrl.u32 %v128, 5
  %v130 = vand.u32 %v128, 31
  %v131 = vsub.s32 32, %v130
  %v132 = vshrl.u32 683565275, %v131
  %v133 = vshll.u32 683565275, %v130
  %v134 = vshrl.u32 2475754826, %v131
  %v135 = vor.u32 %v133, %v134
  %v136 = vshll.u32 2475754826, %v130
  %v137 = vshrl.u32 2131351028, %v131
  %v138 = vor.u32 %v136, %v137
  %v139 = vshll.u32 2131351028, %v130
  %v140 = vshrl.u32 2102212464, %v131
  %v141 = vor.u32 %v139, %v140
  %v142 = vshll.u32 2102212464, %v130
  %v143 = vshrl.u32 920167782, %v131
  %v144 = vor.u32 %v142, %v143
  %v145 = vshll.u32 920167782, %v130
  %v146 = vshrl.u32 1326507024, %v131
  %v147 = vor.u32 %v145, %v146
  %vm148 = vcmp.lt.s32.totalorder %v129, 1
  %vm149 = vcmp.lt.s32.totalorder %v129, 2
  %vm150 = vcmp.lt.s32.totalorder %v129, 3
  %vm151 = vcmp.lt.s32.totalorder %v129, 4
  %v152 = vsel %vm148, %v132, %v135
  %v153 = vsel %vm151, %v141, 2102212464
  %v154 = vsel %vm150, %v138, %v153
  %v155 = vsel %vm149, %v152, %v154
  %v156 = vsel %vm148, %v135, %v138
  %v157 = vsel %vm151, %v144, 920167782
  %v158 = vsel %vm150, %v141, %v157
  %v159 = vsel %vm149, %v156, %v158
  %v160 = vsel %vm148, %v138, %v141
  %v161 = vsel %vm151, %v147, 1326507024
  %v162 = vsel %vm150, %v144, %v161
  %v163 = vsel %vm149, %v160, %v162
  %v164 = vshll.u32 %v124, 8
  %v165 = vmul.u32.u64.compose %v164, %v163
  %v166 = vextract.low.u32 %v165
  %v167 = vextract.high.u32 %v165
  %v168 = vmul.u32.u64.compose %v164, %v159
  %v169 = vextract.low.u32 %v168
  %v170 = vextract.high.u32 %v168
  %v171 = vmul.u32 %v164, %v155
  %v172 = vadd.s32 %v167, %v169
  %vm173 = vc.u32 %v167, %v169
  %v174 = vadd.s32 %v170, 1
  %v175 = vsel %vm173, %v174, %v170
  %v176 = vadd.s32 %v171, %v175
  %v177 = vadd.s32 %v176, 536870912
  %v178 = vshrl.u32 %v177, 30
  %v179 = vshll.u32 %v178, 30
  %v180 = vsub.s32 %v176, %v179
  %vm181 = vcmp.lt.s32.totalorder %v180, 0
  %v182 = vsub.s32 0, %v180
  %v183 = vsel %vm181, %v182, %v180
  %v184 = vclz %v183
  %v185 = vsub.s32 %v184, 2
  %vm186 = vcmp.gt.s32.totalorder 0, %v185
  %v187 = vsel %vm186, 0, %v185
  %v188 = vsub.s32 32, %v187
  %v189 = vshll.u32 %v180, %v187
  %v190 = vshrl.u32 %v172, %v188
  %v191 = vor.u32 %v189, %v190
  %v192 = vsub.s32 4294967266, %v187
  %v193 = vadd.s32 %v192, 127
  %v194 = vshll.u32 %v193, 23
  %v195 = vor.u32 4788187, %v194
  %v196 = vand.u32 2147483647, %v195
  %v198 = vcvt.s32.f32 %v191
  %v199 = vmul.f32 %v198, %v196
  %v200 = vxor.u32 %v199, 2147483648
  %v201 = vsel %vm118, %v200, %v199
  %v202 = vsub.s32 4, %v178
  %v203 = vsel %vm118, %v202, %v178
  %v204 = vsel %vm117, %v11, %v201
  %v205 = vsel %vm117, 0, %v203
  %v206 = vcosq.f32.pop %v204
  %v207 = vsinq.f32.pop %v204
  %vm208 = vweird.f32 %v11
  %v209 = vand.u32 %v205, 3
  %vm210 = vcmp.lt.s32.totalorder %v209, 2
  %vm211 = vcmp.eq.s32.totalorder %v209, 0
  %v212 = vxor.u32 %v207, 2147483648
  %v213 = vsel %vm211, %v206, %v212
  %vm214 = vcmp.eq.s32.totalorder %v209, 2
  %v215 = vxor.u32 %v206, 2147483648
  %v216 = vsel %vm214, %v215, %v207
  %v217 = vsel %vm210, %v213, %v216
  %v218 = vsel %vm208, nan, %v217
  %v219 = vlaneseq
  %v220 = vand.u32 %v219, 127
  %v221 = vadd.s32 %v220, 128
  %v222 = vand.u32 %v220, 1
  %v223 = vand.u32 %v221, 1
  %vm224 = vcmp.eq.s32.totalorder %v222, 0
  %vm225 = vcmp.eq.s32.totalorder %v223, 0
  %v227 = vlaneseq
  %v228 = vshrl.u32 %v227, 7
  %v229 = vsub.s32 0, %v228
  %v230 = vrot.slane %v115, %v229
  %v231 = vlaneseq
  %v232 = vshrl.u32 %v231, 7
  %v233 = vsub.s32 1, %v232
  %v234 = vrot.slane %v115, %v233
  %237 = vrot.lane.b32.xlu0 %v230, 127
  %v238 = vpop.permute.xlu0 %237
  %239 = vrot.lane.b32.xlu0 %v234, 127
  %v240 = vpop.permute.xlu0 %239
  %vm241 = vcmp.lt.s32.totalorder %v220, 127
  %v242 = vsel %vm241, %v238, %v240
  %v243 = vsel %vm241, %v240, %v238
  %244 = vrot.lane.b32.xlu0 %v230, 1
  %v245 = vpop.permute.xlu0 %244
  %246 = vrot.lane.b32.xlu0 %v234, 1
  %v247 = vpop.permute.xlu0 %246
  %vm248 = vcmp.lt.s32.totalorder %v220, 1
  %v249 = vsel %vm248, %v245, %v247
  %v250 = vsel %vm248, %v247, %v245
  %v251 = vsel %vm224, %v242, %v250
  %v252 = vsel %vm225, %v243, %v249
  %v254 = vlaneseq
  %v255 = vshrl.u32 %v254, 7
  %v256 = vsub.s32 0, %v255
  %v257 = vrot.slane %v218, %v256
  %v258 = vlaneseq
  %v259 = vshrl.u32 %v258, 7
  %v260 = vsub.s32 1, %v259
  %v261 = vrot.slane %v218, %v260
  %264 = vrot.lane.b32.xlu0 %v257, 127
  %v265 = vpop.permute.xlu0 %264
  %266 = vrot.lane.b32.xlu0 %v261, 127
  %v267 = vpop.permute.xlu0 %266
  %v268 = vsel %vm241, %v265, %v267
  %v269 = vsel %vm241, %v267, %v265
  %270 = vrot.lane.b32.xlu0 %v257, 1
  %v271 = vpop.permute.xlu0 %270
  %272 = vrot.lane.b32.xlu0 %v261, 1
  %v273 = vpop.permute.xlu0 %272
  %v274 = vsel %vm248, %v271, %v273
  %v275 = vsel %vm248, %v273, %v271
  %v276 = vsel %vm224, %v268, %v275
  %v277 = vsel %vm225, %v269, %v274
  %v278 = vld [vmem:[%s0] sm:$0x3]
  %s279 = scalar_lea.vmem %s0, 2
  %v280 = vld [vmem:[%s279] sm:$0x3]
  %v281 = vmul.f32 %v280, %v115
  %s282 = scalar_lea.vmem %s0, 4
  %v283 = vld [vmem:[%s282] sm:$0x3]
  %v284 = vmul.f32 %v283, %v218
  %v285 = vadd.f32 %v281, %v284
  %v286 = vadd.f32 %v278, %v285
  %s287 = scalar_lea.vmem %s0, 6
  %v288 = vld [vmem:[%s287] sm:$0x3]
  %v291 = vcombine.low %v251, %v252
  %v293 = vunpack.c.l.s4 1966171168
  %v294 = vunpack.c.0.s8 %v293
  %v295 = vlaneseq
  %v296 = vshrl.u32 %v295, 7
  %v297 = vsub.s32 %v294, %v296
  %v298 = vrot.slane %v291, %v297
  %v300 = vunpack.c.l.s4 1966171168
  %v301 = vunpack.c.0.s8 %v300
  %v302 = vlaneseq
  %v303 = vshrl.u32 %v302, 7
  %v304 = vsub.s32 %v301, %v303
  %v305 = vrot.slane %v298, %v304
  %v307 = vmul.f32 %v288, %v305
  %s308 = scalar_lea.vmem %s0, 8
  %v309 = vld [vmem:[%s308] sm:$0x3]
  %v312 = vcombine.low %v276, %v277
  %v314 = vunpack.c.l.s4 1966171168
  %v315 = vunpack.c.0.s8 %v314
  %v316 = vlaneseq
  %v317 = vshrl.u32 %v316, 7
  %v318 = vsub.s32 %v315, %v317
  %v319 = vrot.slane %v312, %v318
  %v321 = vunpack.c.l.s4 1966171168
  %v322 = vunpack.c.0.s8 %v321
  %v323 = vlaneseq
  %v324 = vshrl.u32 %v323, 7
  %v325 = vsub.s32 %v322, %v324
  %v326 = vrot.slane %v319, %v325
  %v328 = vmul.f32 %v309, %v326
  %v329 = vadd.f32 %v307, %v328
  %s330 = scalar_lea.vmem %s0, 10
  %v331 = vld [vmem:[%s330] sm:$0x3]
  %v332 = vmul.f32 %v115, %v305
  %v333 = vmul.f32 %v331, %v332
  %s334 = scalar_lea.vmem %s0, 12
  %v335 = vld [vmem:[%s334] sm:$0x3]
  %v336 = vmul.f32 %v115, %v326
  %v337 = vmul.f32 %v335, %v336
  %v338 = vadd.f32 %v333, %v337
  %s339 = scalar_lea.vmem %s0, 14
  %v340 = vld [vmem:[%s339] sm:$0x3]
  %v341 = vmul.f32 %v218, %v305
  %v342 = vmul.f32 %v340, %v341
  %s343 = scalar_lea.vmem %s0, 16
  %v344 = vld [vmem:[%s343] sm:$0x3]
  %v345 = vmul.f32 %v218, %v326
  %v346 = vmul.f32 %v344, %v345
  %v347 = vadd.f32 %v342, %v346
  %v348 = vadd.f32 %v286, %v329
  %v349 = vadd.f32 %v338, %v347
  %v350 = vadd.f32 %v348, %v349
  %v351 = vlaneseq
  %vm352 = vcmp.ge.s32.totalorder %v351, 0
  %vm353 = vcmp.lt.s32.totalorder %v351, 256
  %vm354 = vmand %vm352, %vm353
  %355 = vst.msk [vmem:[%s2] sm:$0x3] %vm354, %v350
  // Predicated region
  $region10: #{torch_layer_forward.1} parent=0 // pred_check
    _
  $region11: #{torch_layer_forward.1} parent=0 // pred_check_branch
    %357 = sbr.rel (0) target = $region13
  $region12: #{torch_layer_forward.1} parent=0 // pred_region
    _
  $region13: #{torch_layer_forward.1} parent=0 // pred_fallthru
    _
  // Predicated region
  $region14: #{torch_layer_forward.1} parent=0 // pred_check
    _
  $region15: #{torch_layer_forward.1} parent=0 // pred_check_branch
    %359 = sbr.rel (0) target = $region17
  $region16: #{torch_layer_forward.1} parent=0 // pred_region
    _
  $region17: #{torch_layer_forward.1} parent=0 // pred_fallthru
    _

</llo_original>
